<compile_context>
chip_gen: v6e
topology: v6e:2x2x1
jax: 0.10.0
libtpu: 0.0.40
codegen_flags: <defaults>
</compile_context>

<pallas_src>
import jax
import jax.numpy as jnp
from jax.experimental import pallas as pl
from jax.experimental.pallas import tpu as pltpu

NUM_SHC = 45        # max_order = 8 -> 1 + 5 + 9 + 13 + 17 = 45 even-order SH coefficients
MAX_TN = 32768      # absolute cap on voxel-tile width (lanes)


def _reconstruction_kernel(a_ref, x_ref, iso_ref, tscale_ref, o_ref):
    # a_ref:      (1, G, C)   SH basis; col 45 = 0 (iso handled by exp path),
    #                         col 46 = 1 (trapped compartment folded into matmul)
    # x_ref:      (1, C, TN)  45 SH coeffs + iso-coeff + trapped, voxels on lane axis
    # iso_ref:    (1, 1, TN)  isotropic diffusivity per voxel
    # tscale_ref: (G, 1)      pre-scaled -b/1000 per gradient direction
    # o_ref:      (1, G, TN)  reconstructed signal

    # Intra-cellular + trapped compartments in a single MXU matmul
    # (zero col 45 contributes nothing, unit col 46 adds x[46] for free).
    intra_trap = jnp.dot(a_ref[0], x_ref[0],
                         preferred_element_type=jnp.float32)          # (G, TN)

    # Extra-cellular compartment: beta[g, v] = exp(-iso[v] * b[g] / 1000).
    beta = jnp.exp(iso_ref[0] * tscale_ref[...])                      # (G, TN)
    extra = beta * x_ref[0, NUM_SHC:NUM_SHC + 1, :]                   # (G, TN)

    o_ref[0] = (intra_trap + extra).astype(o_ref.dtype)


def _round_up(x, m):
    return ((x + m - 1) // m) * m


def _vmem_capacity_bytes():
    """Trace-time VMEM capacity query; conservative 64 MiB fallback (v7x per-TC)."""
    try:
        info = pltpu.get_tpu_info()
        for name in ("vmem_capacity_bytes", "vmem_capacity", "vmem_bytes"):
            v = getattr(info, name, None)
            if v:
                return int(v)
    except Exception:
        pass
    return 64 << 20


def _pick_voxel_tile(n, c, g, bs, vmem_cap):
    """Voxel-tile width TN (multiple of 128, sized to the device's VMEM)."""
    # Double-buffered per-step footprint: x (C rows) + iso (1 row) + out (G rows), f32.
    bytes_per_lane = 2 * 4 * (c + 1 + g)
    budget = (vmem_cap * 5) // 8                 # headroom under vmem_limit_bytes
    tn = (budget // bytes_per_lane) // 128 * 128
    tn = max(128, min(tn, MAX_TN, _round_up(n, 128)))
    # Keep >= ~8 total grid steps so megacore sharding + DMA pipelining engage.
    min_tiles = max(1, -(-8 // bs))
    tn = max(128, min(tn, _round_up(-(-n // min_tiles), 128)))
    # Prefer a tile that divides n exactly (no ragged boundary block), without
    # shrinking below half the budgeted tile.
    for cand in range(tn, max(128, tn // 2) - 1, -128):
        if n % cand == 0:
            return cand
    return tn                                     # ragged last tile handled by Pallas


def reconstruction(x_fodf_coff_shc, iso, table, A):
    """Pallas equivalent of Reconstruction.forward.

    Args:
      x_fodf_coff_shc: (bs, 47, D, D, D) float32
      iso:             (bs, 1, 1, D, D, D) float32
      table:           (1, G, 1, 1, 1, 1) float32 (b-values per direction)
      A:               (bs, G, 45) float32
    Returns:
      (bs, G, D, D, D) float32
    """
    bs, C, D = x_fodf_coff_shc.shape[:3]
    G = A.shape[1]
    N = D * D * D

    vmem_cap = _vmem_capacity_bytes()
    TN = _pick_voxel_tile(N, C, G, bs, vmem_cap)
    n_tiles = pl.cdiv(N, TN)   # ragged last tile -> Pallas boundary block (masked store)

    # Flattened-voxel layout; reshapes on contiguous trailing dims are free.
    x_flat = x_fodf_coff_shc.reshape(bs, C, N).astype(jnp.float32)
    iso_flat = iso.reshape(bs, 1, N).astype(jnp.float32)

    # Pad A's SH axis 45 -> C: col 45 = 0 (iso term uses the exp path),
    # col 46 = 1 (trapped compartment folded into the matmul).  A is tiny.
    A32 = A.astype(jnp.float32)
    A_pad = jnp.concatenate(
        [A32,
         jnp.zeros((bs, G, 1), jnp.float32),
         jnp.ones((bs, G, 1), jnp.float32)], axis=-1)

    # Pre-fold the -1/1000 constant into the (tiny, G-element) b-value table.
    table_scaled = (-(table.reshape(G, 1)) / 1000.0).astype(jnp.float32)

    out_flat = pl.pallas_call(
        _reconstruction_kernel,
        out_shape=jax.ShapeDtypeStruct((bs, G, N), jnp.float32),
        grid_spec=pltpu.PrefetchScalarGridSpec(
            num_scalar_prefetch=0,
            grid=(bs, n_tiles),
            in_specs=[
                pl.BlockSpec((1, G, C), lambda a, n: (a, 0, 0)),    # A: resident across voxel axis
                pl.BlockSpec((1, C, TN), lambda a, n: (a, 0, n)),   # x (47 channels)
                pl.BlockSpec((1, 1, TN), lambda a, n: (a, 0, n)),   # iso
                pl.BlockSpec((G, 1), lambda a, n: (0, 0)),          # -b/1000 table (shared)
            ],
            out_specs=pl.BlockSpec((1, G, TN), lambda a, n: (a, 0, n)),
        ),
        compiler_params=pltpu.CompilerParams(
            # Every grid point writes a distinct output block: fully parallel grid,
            # so both axes can shard across TensorCores (v7x megacore).
            dimension_semantics=("parallel", "parallel"),
            vmem_limit_bytes=int((vmem_cap * 3) // 4),
        ),
    )(A_pad, x_flat, iso_flat, table_scaled)

    return out_flat.reshape(bs, G, D, D, D)


def reconstruction_ref(x, iso, table, A):
    """Pure-JAX transcription of the PyTorch forward (for verification)."""
    bs, _, D, _, _ = x.shape
    G = A.shape[1]
    beta = jnp.exp(-iso * table / 1000.0).reshape(bs, G, 1, D, D, D)
    intra = jnp.einsum('agb,abijk->agijk', A, x[:, :-2])
    extra = jnp.einsum('agbijk,abijk->agijk', beta, x[:, 45:46])
    trap = jnp.einsum('agb,abijk->agijk',
                      jnp.ones((bs, G, 1), dtype=x.dtype), x[:, 46:47])
    return intra + extra + trap


if __name__ == "__main__":
    bs = 2            # batch
    G = 16            # num_features (gradient directions)
    D = 8             # spatial edge length
    C = NUM_SHC + 2   # 45 SH coefficients + iso + trapped = 47

    key = jax.random.PRNGKey(0)
    k1, k2, k3, k4 = jax.random.split(key, 4)

    x_fodf_coff_shc = jax.random.normal(k1, (bs, C, D, D, D), dtype=jnp.float32)
    iso = jax.random.uniform(k2, (bs, 1, 1, D, D, D), dtype=jnp.float32,
                             minval=0.1, maxval=3.0)          # diffusivities
    table = jax.random.uniform(k3, (1, G, 1, 1, 1, 1), dtype=jnp.float32,
                               minval=0.0, maxval=3000.0)     # b-values
    A = jax.random.normal(k4, (bs, G, NUM_SHC), dtype=jnp.float32)

    out = reconstruction(x_fodf_coff_shc, iso, table, A)
    out = jax.block_until_ready(out)

    ref = reconstruction_ref(x_fodf_coff_shc, iso, table, A)
    assert out.shape == (bs, G, D, D, D)
    assert jnp.allclose(out, ref, rtol=1e-4, atol=1e-4), \
        f"max abs err = {jnp.max(jnp.abs(out - ref))}"

    print("KERNEL_OK")
</pallas_src>

<mosaic_0001>
module attributes {stable_mosaic.version = 11 : i64} {
  func.func @_reconstruction_kernel(%arg0: i32, %arg1: i32, %arg2: memref<1x16x47xf32, #tpu.memory_space<vmem>>, %arg3: memref<1x47x128xf32, #tpu.memory_space<vmem>>, %arg4: memref<1x1x128xf32, #tpu.memory_space<vmem>>, %arg5: memref<16x1xf32, #tpu.memory_space<vmem>>, %arg6: memref<1x16x128xf32, #tpu.memory_space<vmem>>) attributes {dimension_semantics = [#tpu.dimension_semantics<parallel>, #tpu.dimension_semantics<parallel>], iteration_bounds = array<i64: 2, 4>, scalar_prefetch = 0 : i64, scratch_operands = 0 : i64, tpu.core_type = #tpu.core_type<tc>, window_params = [{transform_indices = @transform_0, window_bounds = array<i64: 1, 16, 47>}, {transform_indices = @transform_1, window_bounds = array<i64: 1, 47, 128>}, {transform_indices = @transform_2, window_bounds = array<i64: 1, 1, 128>}, {pipeline_mode = #tpu.pipeline_mode<synchronous>, transform_indices = @transform_3, window_bounds = array<i64: 16, 1>}, {transform_indices = @transform_4, window_bounds = array<i64: 1, 16, 128>}]} {
    %c0 = arith.constant 0 : index
    %c0_0 = arith.constant 0 : index
    %c0_1 = arith.constant 0 : index
    %0 = vector.load %arg2[%c0, %c0_0, %c0_1] : memref<1x16x47xf32, #tpu.memory_space<vmem>>, vector<1x16x47xf32>
    %1 = vector.shape_cast %0 : vector<1x16x47xf32> to vector<16x47xf32>
    %c0_2 = arith.constant 0 : index
    %c0_3 = arith.constant 0 : index
    %c0_4 = arith.constant 0 : index
    %2 = vector.load %arg3[%c0_2, %c0_3, %c0_4] : memref<1x47x128xf32, #tpu.memory_space<vmem>>, vector<1x47x128xf32>
    %3 = vector.shape_cast %2 : vector<1x47x128xf32> to vector<47x128xf32>
    %cst = arith.constant dense<0.000000e+00> : vector<16x128xf32>
    %4 = tpu.matmul %1, %3, %cst {dimension_numbers = #tpu.dot_dimension_numbers<[1], [0], [0], [1], [0, 0, 1, 1], [], []>} : vector<16x47xf32>, vector<47x128xf32>, vector<16x128xf32> -> vector<16x128xf32>
    %c0_5 = arith.constant 0 : index
    %c0_6 = arith.constant 0 : index
    %c0_7 = arith.constant 0 : index
    %5 = vector.load %arg4[%c0_5, %c0_6, %c0_7] : memref<1x1x128xf32, #tpu.memory_space<vmem>>, vector<1x1x128xf32>
    %6 = vector.shape_cast %5 : vector<1x1x128xf32> to vector<1x128xf32>
    %c0_8 = arith.constant 0 : index
    %c0_9 = arith.constant 0 : index
    %7 = vector.load %arg5[%c0_8, %c0_9] : memref<16x1xf32, #tpu.memory_space<vmem>>, vector<16x1xf32>
    %8 = vector.broadcast %6 : vector<1x128xf32> to vector<16x128xf32>
    %9 = vector.broadcast %7 : vector<16x1xf32> to vector<16x128xf32>
    %10 = arith.mulf %8, %9 : vector<16x128xf32>
    %11 = math.exp %10 : vector<16x128xf32>
    %c0_10 = arith.constant 0 : index
    %c45 = arith.constant 45 : index
    %c0_11 = arith.constant 0 : index
    %12 = vector.load %arg3[%c0_10, %c45, %c0_11] : memref<1x47x128xf32, #tpu.memory_space<vmem>>, vector<1x1x128xf32>
    %13 = vector.shape_cast %12 : vector<1x1x128xf32> to vector<1x128xf32>
    %14 = vector.broadcast %13 : vector<1x128xf32> to vector<16x128xf32>
    %15 = arith.mulf %11, %14 : vector<16x128xf32>
    %16 = arith.addf %4, %15 : vector<16x128xf32>
    %c0_12 = arith.constant 0 : index
    %c0_13 = arith.constant 0 : index
    %c0_14 = arith.constant 0 : index
    %17 = vector.load %arg6[%c0_12, %c0_13, %c0_14] : memref<1x16x128xf32, #tpu.memory_space<vmem>>, vector<1x16x128xf32>
    %18 = vector.shape_cast %17 : vector<1x16x128xf32> to vector<16x128xf32>
    %19 = vector.shape_cast %16 : vector<16x128xf32> to vector<1x16x128xf32>
    tpu.vector_store %arg6[%c0_12, %c0_13, %c0_14], %19 {strides = array<i32>} : memref<1x16x128xf32, #tpu.memory_space<vmem>>, vector<1x16x128xf32>,
    return
  }
  func.func @transform_0(%arg0: i32, %arg1: i32) -> (i32, i32, i32) {
    %c0_i32 = arith.constant 0 : i32
    %c0_i32_0 = arith.constant 0 : i32
    %c0_i32_1 = arith.constant 0 : i32
    return %arg0, %c0_i32, %c0_i32_0 : i32, i32, i32
  }
  func.func @transform_1(%arg0: i32, %arg1: i32) -> (i32, i32, i32) {
    %c0_i32 = arith.constant 0 : i32
    %c0_i32_0 = arith.constant 0 : i32
    return %arg0, %c0_i32, %arg1 : i32, i32, i32
  }
  func.func @transform_2(%arg0: i32, %arg1: i32) -> (i32, i32, i32) {
    %c0_i32 = arith.constant 0 : i32
    %c0_i32_0 = arith.constant 0 : i32
    return %arg0, %c0_i32, %arg1 : i32, i32, i32
  }
  func.func @transform_3(%arg0: i32, %arg1: i32) -> (i32, i32) {
    %c0_i32 = arith.constant 0 : i32
    %c0_i32_0 = arith.constant 0 : i32
    %c0_i32_1 = arith.constant 0 : i32
    return %c0_i32, %c0_i32_0 : i32, i32
  }
  func.func @transform_4(%arg0: i32, %arg1: i32) -> (i32, i32, i32) {
    %c0_i32 = arith.constant 0 : i32
    %c0_i32_0 = arith.constant 0 : i32
    return %arg0, %c0_i32, %arg1 : i32, i32, i32
  }
}

</mosaic_0001>

<llo_original>
// kernel: tpu_custom_call.1
$region0: #{tpu_custom_call.1}
  #allocation0 [shape = 'u32[]', space=smem, size = 0x4, offset = 0x4, fixed_abs, tag = 'smem constant byte address 0x4 - core index']
  #allocation1 [shape = 'u32[144,128]{1,0:T(1,128)}', space=vmem, size = 0x12000, scoped, tag = 'internal scratch']
  %s0 = inlined_call_operand.vmem [shape: f32[2,16,47], index: 0, kind: input, shape index: {}]
  %s1 = inlined_call_operand.vmem [shape: f32[2,47,512], index: 1, kind: input, shape index: {}]
  %s2 = inlined_call_operand.vmem [shape: f32[2,1,512], index: 2, kind: input, shape index: {}]
  %s3 = inlined_call_operand.vmem [shape: f32[16,1], index: 3, kind: input, shape index: {}]
  %s4 = inlined_call_operand.hbm [shape: f32[2,16,512], index: 4, kind: output, shape index: {}]
  %s5 = sld [smem:[#allocation0]]
  $region87: #{tpu_custom_call.1} parent=0
    _
  %s7 = ssub.s32 1, %s5
  %s8 = scalar_select 0, %s7, %s5
  $region1: #{tpu_custom_call.1} parent=0
    #allocation2 [shape = 'u8[49152]{0}', space=vmem, size = 0xc000, scoped, tag = 'input window, operand 1']
    #allocation3 [shape = 'u8[16384]{0}', space=vmem, size = 0x4000, scoped, tag = 'output window, operand 0']
    #allocation4 [shape = 's32[2]{0}', space=sflag, size = 0x8, scoped, tag = 'scoped memory for tpu_custom_call.1']
    %9 = vsyncpa [#allocation4], 0
    %s10 = scalar_lea.sflag [#allocation4], 1
    %11 = vsyncpa %s10, 0
    loop: start=0, step=1, limit=10
    $region2: #{tpu_custom_call.1} parent=1 // loop_pre_header
      _
    $region3: #{tpu_custom_call.1} parent=1 // loop_header
      %s13 = sphi 0, %s17
      %p14 = scmp.ge.s32.totalorder %s13, 10
      %s20 = sphi 0, %s32
      %s21 = sphi 0, %s28
      %s22 = sphi 0, %s20
      %s23 = sphi 0, %s21
      %s24 = sphi 0, %s22
      %s25 = sphi 0, %s23
      %s35 = sphi 0, %s37
      %s38 = sphi 0, %s35
      %s39 = sphi 0, %s38
      %s55 = sphi 0, %s39
      %s63 = sphi 0, %s65
      %s66 = sphi 0, %s63
      %s67 = sphi 0, %s66
      %s83 = sphi 0, %s67
      %s91 = sphi 0, %s93
      %s94 = sphi 0, %s91
      %s95 = sphi 0, %s94
      %s111 = sphi 0, %s95
      %s115 = sphi 0, %s115
      %s117 = sphi 0, %s115
      %s118 = sphi 0, %s117
      %s132 = sphi 0, %s118
      %s140 = sphi 0, %s142
      %s143 = sphi 0, %s140
      %s144 = sphi 0, %s143
      %s160 = sphi 0, %s144
    $region4: #{tpu_custom_call.1} parent=1 // loop_header_branch
      %16 = sbr.rel (%p14) target = $region8
    $region5: #{tpu_custom_call.1} parent=1 // loop_body
      %s18 = ssub.s32 %s13, 1
      %s19 = ssub.s32 %s13, 2
      %s26 = sadd.s32 1, %s21
      %p27 = scmp.ge.s32.totalorder %s26, 4
      %s28 = scalar_select %p27, 0, %s26
      %s29 = sadd.s32 1, %s20
      %s30 = scalar_select %p27, %s29, %s20
      %p31 = scmp.ge.s32.totalorder %s30, 2
      %s32 = scalar_select %p31, 0, %s30
      %s33 = ssub.s32 %s20, %s32
      %p34 = scmp.eq.s32.totalorder %s33, 0
      %s36 = sadd.s32 %s35, 1
      %s37 = scalar_select %p34, %s35, %s36
      %p40 = pneg %p34
      %p41 = scmp.eq.s32.totalorder %s13, 7
      %p42 = por %p40, %p41
      %p43 = scmp.ne.s32.totalorder %s35, %s38
      %p44 = scmp.eq.s32.totalorder %s13, 0
      %p45 = por %p43, %p44
      %p46 = scmp.ne.s32.totalorder %s35, %s38
      %p47 = scmp.eq.s32.totalorder %s18, 7
      %p48 = por %p46, %p47
      %p49 = scmp.ne.s32.totalorder %s38, %s39
      %p50 = scmp.eq.s32.totalorder %s18, 0
      %p51 = por %p49, %p50
      %p52 = scmp.ne.s32.totalorder %s38, %s39
      %p53 = scmp.eq.s32.totalorder %s19, 7
      %p54 = por %p52, %p53
      %p56 = scmp.ne.s32.totalorder %s39, %s55
      %p57 = scmp.eq.s32.totalorder %s19, 0
      %p58 = por %p56, %p57
      %s59 = ssub.s32 %s20, %s32
      %s60 = ssub.s32 %s21, %s28
      %s61 = sor.u32 %s59, %s60
      %p62 = scmp.eq.s32.totalorder %s61, 0
      %s64 = sadd.s32 %s63, 1
      %s65 = scalar_select %p62, %s63, %s64
      %p68 = pneg %p62
      %p69 = scmp.eq.s32.totalorder %s13, 7
      %p70 = por %p68, %p69
      %p71 = scmp.ne.s32.totalorder %s63, %s66
      %p72 = scmp.eq.s32.totalorder %s13, 0
      %p73 = por %p71, %p72
      %p74 = scmp.ne.s32.totalorder %s63, %s66
      %p75 = scmp.eq.s32.totalorder %s18, 7
      %p76 = por %p74, %p75
      %p77 = scmp.ne.s32.totalorder %s66, %s67
      %p78 = scmp.eq.s32.totalorder %s18, 0
      %p79 = por %p77, %p78
      %p80 = scmp.ne.s32.totalorder %s66, %s67
      %p81 = scmp.eq.s32.totalorder %s19, 7
      %p82 = por %p80, %p81
      %p84 = scmp.ne.s32.totalorder %s67, %s83
      %p85 = scmp.eq.s32.totalorder %s19, 0
      %p86 = por %p84, %p85
      %s87 = ssub.s32 %s20, %s32
      %s88 = ssub.s32 %s21, %s28
      %s89 = sor.u32 %s87, %s88
      %p90 = scmp.eq.s32.totalorder %s89, 0
      %s92 = sadd.s32 %s91, 1
      %s93 = scalar_select %p90, %s91, %s92
      %p96 = pneg %p90
      %p97 = scmp.eq.s32.totalorder %s13, 7
      %p98 = por %p96, %p97
      %p99 = scmp.ne.s32.totalorder %s91, %s94
      %p100 = scmp.eq.s32.totalorder %s13, 0
      %p101 = por %p99, %p100
      %p102 = scmp.ne.s32.totalorder %s91, %s94
      %p103 = scmp.eq.s32.totalorder %s18, 7
      %p104 = por %p102, %p103
      %p105 = scmp.ne.s32.totalorder %s94, %s95
      %p106 = scmp.eq.s32.totalorder %s18, 0
      %p107 = por %p105, %p106
      %p108 = scmp.ne.s32.totalorder %s94, %s95
      %p109 = scmp.eq.s32.totalorder %s19, 7
      %p110 = por %p108, %p109
      %p112 = scmp.ne.s32.totalorder %s95, %s111
      %p113 = scmp.eq.s32.totalorder %s19, 0
      %p114 = por %p112, %p113
      %s116 = sadd.s32 %s115, 1
      %p119 = scmp.eq.s32.totalorder %s13, 7
      %p120 = scmp.ne.s32.totalorder %s115, %s117
      %p121 = scmp.eq.s32.totalorder %s13, 0
      %p122 = por %p120, %p121
      %p123 = scmp.ne.s32.totalorder %s115, %s117
      %p124 = scmp.eq.s32.totalorder %s18, 7
      %p125 = por %p123, %p124
      %p126 = scmp.ne.s32.totalorder %s117, %s118
      %p127 = scmp.eq.s32.totalorder %s18, 0
      %p128 = por %p126, %p127
      %p129 = scmp.ne.s32.totalorder %s117, %s118
      %p130 = scmp.eq.s32.totalorder %s19, 7
      %p131 = por %p129, %p130
      %p133 = scmp.ne.s32.totalorder %s118, %s132
      %p134 = scmp.eq.s32.totalorder %s19, 0
      %p135 = por %p133, %p134
      %s136 = ssub.s32 %s20, %s32
      %s137 = ssub.s32 %s21, %s28
      %s138 = sor.u32 %s136, %s137
      %p139 = scmp.eq.s32.totalorder %s138, 0
      %s141 = sadd.s32 %s140, 1
      %s142 = scalar_select %p139, %s140, %s141
      %p145 = pneg %p139
      %p146 = scmp.eq.s32.totalorder %s13, 7
      %p147 = por %p145, %p146
      %p148 = scmp.ne.s32.totalorder %s140, %s143
      %p149 = scmp.eq.s32.totalorder %s13, 0
      %p150 = por %p148, %p149
      %p151 = scmp.ne.s32.totalorder %s140, %s143
      %p152 = scmp.eq.s32.totalorder %s18, 7
      %p153 = por %p151, %p152
      %p154 = scmp.ne.s32.totalorder %s143, %s144
      %p155 = scmp.eq.s32.totalorder %s18, 0
      %p156 = por %p154, %p155
      %p157 = scmp.ne.s32.totalorder %s143, %s144
      %p158 = scmp.eq.s32.totalorder %s19, 7
      %p159 = por %p157, %p158
      %p161 = scmp.ne.s32.totalorder %s144, %s160
      %p162 = scmp.eq.s32.totalorder %s19, 0
      %p163 = por %p161, %p162
      %p164 = scmp.le.s32.totalorder 1, %s13
      %p165 = scmp.lt.s32.totalorder %s13, 9
      %p166 = pnand %p164, %p165
      %p167 = pneg %p166
      // Predicated region
      $region9: #{tpu_custom_call.1} parent=5 // pred_check
        _
      $region10: #{tpu_custom_call.1} parent=5 // pred_check_branch
        %169 = sbr.rel (%p166) target = $region12
      $region11: #{tpu_custom_call.1} parent=5 // pred_region
        %s170 = ssub.s32 %s13, 1
        // Predicated region
        $region13: #{tpu_custom_call.1} parent=11 // pred_check
          %p171 = pneg %p128
        $region14: #{tpu_custom_call.1} parent=11 // pred_check_branch
          %173 = sbr.rel (%p171) target = $region16
        $region15: #{tpu_custom_call.1} parent=11 // pred_region
          _
        $region16: #{tpu_custom_call.1} parent=11 // pred_fallthru
          _
      $region12: #{tpu_custom_call.1} parent=5 // pred_fallthru
        _
      %p174 = scmp.lt.s32.totalorder %s13, 8
      // Predicated region
      $region17: #{tpu_custom_call.1} parent=5 // pred_check
        %p175 = pneg %p174
      $region18: #{tpu_custom_call.1} parent=5 // pred_check_branch
        %177 = sbr.rel (%p175) target = $region20
      $region19: #{tpu_custom_call.1} parent=5 // pred_region
        // Predicated region
        $region21: #{tpu_custom_call.1} parent=19 // pred_check
          %p178 = pneg %p45
        $region22: #{tpu_custom_call.1} parent=19 // pred_check_branch
          %180 = sbr.rel (%p178) target = $region24
        $region23: #{tpu_custom_call.1} parent=19 // pred_region
          %p181 = scmp.lt.s32.totalorder %s20, 1
          %s182 = scalar_select %p181, %s20, 1
          %s183 = smul.addr %s182, 2
          %s184 = smul.addr %s183, 8
          %s185 = scalar_lea.vmem %s0, %s184
        $region24: #{tpu_custom_call.1} parent=19 // pred_fallthru
          _
        // Predicated region
        $region25: #{tpu_custom_call.1} parent=19 // pred_check
          %p186 = pneg %p73
        $region26: #{tpu_custom_call.1} parent=19 // pred_check_branch
          %188 = sbr.rel (%p186) target = $region28
        $region27: #{tpu_custom_call.1} parent=19 // pred_region
          %s189 = sand.u32 %s63, 1
          %s190 = sand.u32 %s63, 1
          %s191 = smul.addr %s190, 48
          %s192 = scalar_lea.vmem [#allocation2], %s191
          %s193 = smul.addr %s20, 24
          %s194 = sadd.s32 %s21, %s193
          %s195 = smul.addr %s194, 8
          %s196 = scalar_lea.vmem %s1, %s195
          // Predicated region
          $region29: #{tpu_custom_call.1} parent=27 // pred_check
            _
          $region30: #{tpu_custom_call.1} parent=27 // pred_check_branch
            %198 = sbr.rel (0) target = $region32
          $region31: #{tpu_custom_call.1} parent=27 // pred_region
            // Predicated region
            $region33: #{tpu_custom_call.1} parent=31 // pred_check
              _
            $region34: #{tpu_custom_call.1} parent=31 // pred_check_branch
              %200 = sbr.rel (0) target = $region36
            $region35: #{tpu_custom_call.1} parent=31 // pred_region
              // Predicated region
              $region48: #{tpu_custom_call.1} parent=35 // pred_check
                _
              $region49: #{tpu_custom_call.1} parent=35 // pred_check_branch
                %226 = sbr.rel (0) target = $region51
              $region50: #{tpu_custom_call.1} parent=35 // pred_region
                loop: start=0, step=1, limit=1
                $region52: #{tpu_custom_call.1} parent=50 // loop_pre_header
                  _
                $region53: #{tpu_custom_call.1} parent=50 // loop_header
                  %s228 = sphi 0, %s232
                  %p229 = scmp.ge.s32.totalorder %s228, 1
                  %s233 = sphi %s196, %s196
                  %s234 = sphi %s192, %s192
                $region54: #{tpu_custom_call.1} parent=50 // loop_header_branch
                  %231 = sbr.rel (%p229) target = $region58
                $region55: #{tpu_custom_call.1} parent=50 // loop_body
                  %v235 = vld [vmem:[%s233] sm:$0xff]
                  %236 = vst [vmem:[%s234] sm:$0xff] %v235
                  %v237 = vld [vmem:[%s233 + $0x20] sm:$0xff]
                  %238 = vst [vmem:[%s234 + $0x8] sm:$0xff] %v237
                  %v239 = vld [vmem:[%s233 + $0x40] sm:$0xff]
                  %240 = vst [vmem:[%s234 + $0x10] sm:$0xff] %v239
                  %v241 = vld [vmem:[%s233 + $0x60] sm:$0xff]
                  %242 = vst [vmem:[%s234 + $0x18] sm:$0xff] %v241
                  %v243 = vld [vmem:[%s233 + $0x80] sm:$0xff]
                  %244 = vst [vmem:[%s234 + $0x20] sm:$0xff] %v243
                  %v245 = vld [vmem:[%s233 + $0xa0] sm:$0xff]
                  %246 = vst [vmem:[%s234 + $0x28] sm:$0xff] %v245
                $region56: #{tpu_custom_call.1} parent=50 // loop_footer
                  %s232 = sadd.s32 1, %s228
                $region57: #{tpu_custom_call.1} parent=50 // loop_footer_branch
                  %227 = sbr.rel target = $region53
                $region58: #{tpu_custom_call.1} parent=50 // loop_exit
                  _
              $region51: #{tpu_custom_call.1} parent=35 // pred_fallthru
                _
              // Predicated region
              $region59: #{tpu_custom_call.1} parent=35 // pred_check
                _
              $region60: #{tpu_custom_call.1} parent=35 // pred_check_branch
                %248 = sbr.rel target = $region62
              $region61: #{tpu_custom_call.1} parent=35 // pred_region
                _
              $region62: #{tpu_custom_call.1} parent=35 // pred_fallthru
                _
            $region36: #{tpu_custom_call.1} parent=31 // pred_fallthru
              _
            // Predicated region
            $region37: #{tpu_custom_call.1} parent=31 // pred_check
              _
            $region38: #{tpu_custom_call.1} parent=31 // pred_check_branch
              %202 = sbr.rel target = $region40
            $region39: #{tpu_custom_call.1} parent=31 // pred_region
              %s204 = ssub.s32 256, 1
              loop: start=0, step=1, limit=1
              $region41: #{tpu_custom_call.1} parent=39 // loop_pre_header
                _
              $region42: #{tpu_custom_call.1} parent=39 // loop_header
                %s206 = sphi 0, %s210
                %p207 = scmp.ge.s32.totalorder %s206, 1
                %s211 = sphi %s196, %s196
                %s212 = sphi %s192, %s192
              $region43: #{tpu_custom_call.1} parent=39 // loop_header_branch
                %209 = sbr.rel (%p207) target = $region47
              $region44: #{tpu_custom_call.1} parent=39 // loop_body
                %v213 = vld [vmem:[%s211] sm:%s204]
                %214 = vst [vmem:[%s212] sm:%s204] %v213
                %v215 = vld [vmem:[%s211 + $0x20] sm:%s204]
                %216 = vst [vmem:[%s212 + $0x8] sm:%s204] %v215
                %v217 = vld [vmem:[%s211 + $0x40] sm:%s204]
                %218 = vst [vmem:[%s212 + $0x10] sm:%s204] %v217
                %v219 = vld [vmem:[%s211 + $0x60] sm:%s204]
                %220 = vst [vmem:[%s212 + $0x18] sm:%s204] %v219
                %v221 = vld [vmem:[%s211 + $0x80] sm:%s204]
                %222 = vst [vmem:[%s212 + $0x20] sm:%s204] %v221
                %v223 = vld [vmem:[%s211 + $0xa0] sm:%s204]
                %224 = vst [vmem:[%s212 + $0x28] sm:%s204] %v223
              $region45: #{tpu_custom_call.1} parent=39 // loop_footer
                %s210 = sadd.s32 1, %s206
              $region46: #{tpu_custom_call.1} parent=39 // loop_footer_branch
                %205 = sbr.rel target = $region42
              $region47: #{tpu_custom_call.1} parent=39 // loop_exit
                _
            $region40: #{tpu_custom_call.1} parent=31 // pred_fallthru
              _
          $region32: #{tpu_custom_call.1} parent=27 // pred_fallthru
            _
          %249 = vnop
        $region28: #{tpu_custom_call.1} parent=19 // pred_fallthru
          _
        // Predicated region
        $region63: #{tpu_custom_call.1} parent=19 // pred_check
          %p250 = pneg %p101
        $region64: #{tpu_custom_call.1} parent=19 // pred_check_branch
          %252 = sbr.rel (%p250) target = $region66
        $region65: #{tpu_custom_call.1} parent=19 // pred_region
          %p253 = scmp.lt.s32.totalorder %s20, 1
          %s254 = scalar_select %p253, %s20, 1
          %p255 = scmp.lt.s32.totalorder %s21, 3
          %s256 = scalar_select %p255, %s21, 3
          %s257 = smul.addr %s254, 4
          %s258 = sadd.s32 %s256, %s257
          %s259 = scalar_lea.vmem %s2, %s258
        $region66: #{tpu_custom_call.1} parent=19 // pred_fallthru
          _
      $region20: #{tpu_custom_call.1} parent=5 // pred_fallthru
        _
      %p260 = scmp.le.s32.totalorder 1, %s13
      %p261 = scmp.lt.s32.totalorder %s13, 9
      %p262 = pnand %p260, %p261
      %p263 = pneg %p262
      // Predicated region
      $region67: #{tpu_custom_call.1} parent=5 // pred_check
        _
      $region68: #{tpu_custom_call.1} parent=5 // pred_check_branch
        %265 = sbr.rel (%p262) target = $region70
      $region69: #{tpu_custom_call.1} parent=5 // pred_region
        %s266 = ssub.s32 %s13, 1
        %s267 = sand.u32 %s66, 1
        %s268 = sand.u32 %s66, 1
        %s269 = smul.addr %s268, 48
        %s270 = scalar_lea.vmem [#allocation2], %s269
        // Predicated region
        $region71: #{tpu_custom_call.1} parent=69 // pred_check
          %p271 = pneg %p79
        $region72: #{tpu_custom_call.1} parent=69 // pred_check_branch
          %273 = sbr.rel (%p271) target = $region74
        $region73: #{tpu_custom_call.1} parent=69 // pred_region
          _
        $region74: #{tpu_custom_call.1} parent=69 // pred_fallthru
          _
        %p274 = scmp.lt.s32.totalorder %s22, 1
        %s275 = scalar_select %p274, %s22, 1
        %s276 = smul.addr %s275, 2
        %s277 = smul.addr %s276, 8
        %s278 = scalar_lea.vmem %s0, %s277
        %p279 = pneg %p51
        %p280 = pneg %p48
        %s281 = sand.u32 %s66, 1
        %s282 = sand.u32 %s66, 1
        %s283 = smul.addr %s282, 48
        %s284 = scalar_lea.vmem [#allocation2], %s283
        %p285 = pneg %p79
        %p286 = pneg %p76
        %p287 = scmp.lt.s32.totalorder %s22, 1
        %s288 = scalar_select %p287, %s22, 1
        %p289 = scmp.lt.s32.totalorder %s23, 3
        %s290 = scalar_select %p289, %s23, 3
        %s291 = smul.addr %s288, 4
        %s292 = sadd.s32 %s290, %s291
        %s293 = scalar_lea.vmem %s2, %s292
        %p294 = pneg %p107
        %p295 = pneg %p104
        %p296 = pneg %p128
        %p297 = pneg %p125
        %p298 = pneg %p156
        %p299 = pneg %p153
        %s300 = sand.u32 %s143, 1
        %s301 = scalar_lea.sflag [#allocation4], %s300
        %s302 = sand.u32 %s143, 1
        %s303 = smul.addr %s302, 16
        %s304 = scalar_lea.vmem [#allocation3], %s303
        %p305 = scmp.lt.s32.totalorder %s22, 1
        %s306 = scalar_select %p305, %s22, 1
        %s307 = smul.addr %s306, 2
        %s308 = smul.addr %s307, 8
        %s309 = scalar_lea.vmem %s0, %s308
        %p310 = scmp.lt.s32.totalorder %s22, 1
        %s311 = scalar_select %p310, %s22, 1
        %p312 = scmp.lt.s32.totalorder %s23, 3
        %s313 = scalar_select %p312, %s23, 3
        %s314 = smul.addr %s311, 4
        %s315 = sadd.s32 %s313, %s314
        %s316 = scalar_lea.vmem %s2, %s315
        %v317 = vld [vmem:[%s309] sm:$0xff]
        %v318 = vld [vmem:[%s309 + $0x8] sm:$0xff]
        %v319 = vld [vmem:[%s270] sm:$0xff]
        %v320 = vld [vmem:[%s270 + $0x8] sm:$0xff]
        %v321 = vld [vmem:[%s270 + $0x10] sm:$0xff]
        %v322 = vld [vmem:[%s270 + $0x18] sm:$0xff]
        %v323 = vld [vmem:[%s270 + $0x20] sm:$0xff]
        %v324 = vld [vmem:[%s270 + $0x28] sm:$0x7f]
        %v325 = vld [vmem:[%s316] sm:$0x1]
        %v326 = vld [vmem:[%s3] sm:$0xff]
        %v327 = vld [vmem:[%s3 + $0x8] sm:$0xff]
        %v329 = vlaneseq
        %v330 = vshrl.u32 %v329, 7
        %v331 = vsub.s32 0, %v330
        %v332 = vrot.slane %v325, %v331
        %335 = vset.pattern.permute.xlu0 0
        %336 = vperm.xlu0 %335, %v326
        %v337 = vpop.permute.xlu0 %336
        %340 = vset.pattern.permute.xlu0 0
        %341 = vperm.xlu0 %340, %v327
        %v342 = vpop.permute.xlu0 %341
        %v344 = vmul.f32 %v332, %v337
        %v345 = vmul.f32 %v332, %v342
        %v346 = vmul.f32 %v344, 1.442695
        %v347 = vpow.pop %v346
        %v348 = vmul.f32 %v345, 1.442695
        %v349 = vpow.pop %v348
        %v350 = vld [vmem:[%s270 + $0x2d] sm:$0x1]
        %v351 = vlaneseq
        %v352 = vshrl.u32 %v351, 7
        %v353 = vsub.s32 0, %v352
        %v354 = vrot.slane %v350, %v353
        %v355 = vmul.f32 %v347, %v354
        %v356 = vmul.f32 %v349, %v354
        %vm357 = vcmask 384000
        %v359 = vsel %vm357, %v317, 0
        %v362 = vsel %vm357, %v318, 0
        %vm364 = vcmask 1046528
        %v366 = vsel %vm364, %v324, 0
        %368 = vmatprep.subr.mxu0 0.0
        %369 = vmatpush1.msra.mxu0 0.0
        %370 = vmatprep.subr.mxu0 0.0
        %371 = vmatpush1.msra.mxu0 0.0
        %372 = vmatprep.subr.mxu0 0.0
        %373 = vmatpush1.msra.mxu0 0.0
        %374 = vmatprep.subr.mxu0 0.0
        %375 = vmatpush1.msra.mxu0 0.0
        %376 = vmatprep.subr.mxu0 0.0
        %377 = vmatpush1.msra.mxu0 0.0
        %378 = vmatprep.subr.mxu0 0.0
        %379 = vmatpush1.msra.mxu0 0.0
        %380 = vmatprep.subr.mxu0 0.0
        %381 = vmatpush1.msra.mxu0 0.0
        %382 = vmatprep.subr.mxu0 0.0
        %383 = vmatpush1.msra.mxu0 0.0
        %384 = vmatprep.subr.mxu0 0.0
        %385 = vmatpush1.msra.mxu0 0.0
        %386 = vmatprep.subr.mxu0 0.0
        %387 = vmatpush1.msra.mxu0 0.0
        %388 = vmatprep.subr.mxu0 0.0
        %389 = vmatpush1.msra.mxu0 %v366
        %390 = vmatprep.subr.mxu0 0.0
        %391 = vmatpush1.msra.mxu0 %v323
        %392 = vmatprep.subr.mxu0 0.0
        %393 = vmatpush1.msra.mxu0 %v322
        %394 = vmatprep.subr.mxu0 0.0
        %395 = vmatpush1.msra.mxu0 %v321
        %396 = vmatprep.subr.mxu0 0.0
        %397 = vmatpush1.msra.mxu0 %v320
        %398 = vmatprep.subr.mxu0 0.0
        %399 = vmatpush1.msra.mxu0 %v319
        %400 = vmatprep.subr.mxu0 0.0
        %401 = vmatpush2.msra.mxu0 0.0
        %402 = vmatprep.subr.mxu0 0.0
        %403 = vmatpush2.msra.mxu0 0.0
        %404 = vmatprep.subr.mxu0 0.0
        %405 = vmatpush2.msra.mxu0 0.0
        %406 = vmatprep.subr.mxu0 0.0
        %407 = vmatpush2.msra.mxu0 0.0
        %408 = vmatprep.subr.mxu0 0.0
        %409 = vmatpush2.msra.mxu0 0.0
        %410 = vmatprep.subr.mxu0 0.0
        %411 = vmatpush2.msra.mxu0 0.0
        %412 = vmatprep.subr.mxu0 0.0
        %413 = vmatpush2.msra.mxu0 0.0
        %414 = vmatprep.subr.mxu0 0.0
        %415 = vmatpush2.msra.mxu0 0.0
        %416 = vmatprep.subr.mxu0 0.0
        %417 = vmatpush2.msra.mxu0 0.0
        %418 = vmatprep.subr.mxu0 0.0
        %419 = vmatpush2.msra.mxu0 0.0
        %420 = vmatprep.subr.mxu0 0.0
        %421 = vmatpush2.msra.mxu0 0.0
        %422 = vmatprep.subr.mxu0 0.0
        %423 = vmatpush2.msra.mxu0 0.0
        %424 = vmatprep.subr.mxu0 0.0
        %425 = vmatpush2.msra.mxu0 0.0
        %426 = vmatprep.subr.mxu0 0.0
        %427 = vmatpush2.msra.mxu0 0.0
        %428 = vmatprep.subr.mxu0 0.0
        %429 = vmatpush2.msra.mxu0 0.0
        %430 = vmatprep.subr.mxu0 0.0
        %431 = vmatpush2.msra.mxu0 0.0
        %432 = vmatprep.mubr.f32.mxu0 0.0
        %433 = vmatmul.mubr.f32.gmra.mxu0 %v359
        %v434 = vpop.f32.mrf.mxu0
        %v435 = vadd.f32 %v355, %v434
        %v436 = vpop.f32.mrf.mxu0
        %437 = vmatprep.mubr.f32.mxu0 0.0
        %438 = vmatmul.mubr.f32.gmra.mxu0 %v362
        %v439 = vpop.f32.mrf.mxu0
        %v440 = vadd.f32 %v356, %v439
        %v441 = vpop.f32.mrf.mxu0
        %442 = vdwg.mxu0
        %443 = vst [vmem:[%s304] sm:$0xff] %v435
        %444 = vst [vmem:[%s304 + $0x8] sm:$0xff] %v440
        %s445 = sand.u32 %s143, 1
        %s446 = scalar_lea.sflag [#allocation4], %s445
        %s447 = sand.u32 %s143, 1
        %s448 = smul.addr %s447, 16
        %s449 = scalar_lea.vmem [#allocation3], %s448
        // Predicated region
        $region75: #{tpu_custom_call.1} parent=69 // pred_check
          %p450 = pneg %p153
        $region76: #{tpu_custom_call.1} parent=69 // pred_check_branch
          %452 = sbr.rel (%p450) target = $region78
        $region77: #{tpu_custom_call.1} parent=69 // pred_region
          %s454 = ssub.s32 256, 256
          %455 = vsyncadd %s446, %s454
          %s456 = smul.addr %s22, 8
          %s457 = sadd.s32 %s23, %s456
          %s458 = smul.addr %s457, 128
          %s459 = scalar_lea.hbm %s4, %s458
          %s460 = sshll.u32 %s449, 4
          %s461 = int_to_ptr.vmem [resolvable:$true] %s460
          %466 = dma.vmem_to_hbm [thread:$0]  %s461, 256, %s459, %s446, 128, 512, 8
        $region78: #{tpu_custom_call.1} parent=69 // pred_fallthru
          _
      $region70: #{tpu_custom_call.1} parent=5 // pred_fallthru
        _
      %p467 = scmp.le.s32.totalorder 2, %s13
      // Predicated region
      $region79: #{tpu_custom_call.1} parent=5 // pred_check
        %p468 = pneg %p467
      $region80: #{tpu_custom_call.1} parent=5 // pred_check_branch
        %470 = sbr.rel (%p468) target = $region82
      $region81: #{tpu_custom_call.1} parent=5 // pred_region
        %s471 = ssub.s32 %s13, 2
        // Predicated region
        $region83: #{tpu_custom_call.1} parent=81 // pred_check
          %p472 = pneg %p159
        $region84: #{tpu_custom_call.1} parent=81 // pred_check_branch
          %474 = sbr.rel (%p472) target = $region86
        $region85: #{tpu_custom_call.1} parent=81 // pred_region
          %s475 = sand.u32 %s144, 1
          %s476 = scalar_lea.sflag [#allocation4], %s475
          %s477 = sand.u32 %s144, 1
          %s478 = smul.addr %s477, 16
          %s479 = scalar_lea.vmem [#allocation3], %s478
          %480 = dma.done %s476, 256
        $region86: #{tpu_custom_call.1} parent=81 // pred_fallthru
          _
      $region82: #{tpu_custom_call.1} parent=5 // pred_fallthru
        _
    $region6: #{tpu_custom_call.1} parent=1 // loop_footer
      %s17 = sadd.s32 1, %s13
    $region7: #{tpu_custom_call.1} parent=1 // loop_footer_branch
      %12 = sbr.rel target = $region3
    $region8: #{tpu_custom_call.1} parent=1 // loop_exit
      _
    %481 = vsyncpa [#allocation4], 1
    %s482 = scalar_lea.sflag [#allocation4], 1
    %483 = vsyncpa %s482, 1

</llo_original>
